<compile_context>
chip_gen: v5e
topology: v5e:2x2
jax: 0.10.0
libtpu: 0.0.40
codegen_flags: <defaults>
</compile_context>

<pallas_src>
import jax
import jax.numpy as jnp
import numpy as np
from jax.experimental import pallas as pl
from jax.experimental.pallas import tpu as pltpu


def critic_kernel(state_ref, action_ref,
                  w1_ref, w2h_ref, w2a_ref,
                  packed_ref,
                  out_ref):
    state = state_ref[...]
    action = action_ref[...]

    # Packed small parameters: row 0 = b1, row 1 = b2, row 2 = fc3 weight row,
    # element [3, 0] = b3.
    packed = packed_ref[...]
    b1 = packed[0:1, :]        # (1, H)
    b2 = packed[1:2, :]        # (1, H)
    w3_row = packed[2:3, :]    # (1, H)
    b3 = packed[3, 0]          # scalar

    # ---- fc1 + ReLU --------------------------------------------------------
    xs = jnp.dot(state, w1_ref[...], preferred_element_type=jnp.float32) + b1
    xs = jnp.maximum(xs, 0.0)

    # ---- BatchNorm1d (training mode: batch stats, biased var, eps=1e-5,
    #      affine defaults gamma=1, beta=0).  One-pass stats: two independent
    #      XLU reductions instead of a serialized mean -> (x-mean)^2 -> var.
    inv_b = jnp.float32(1.0 / xs.shape[0])
    s = jnp.sum(xs, axis=0, keepdims=True)
    ss = jnp.sum(xs * xs, axis=0, keepdims=True)
    mean = s * inv_b
    var = jnp.maximum(ss * inv_b - mean * mean, 0.0)
    bn = (xs - mean) * jax.lax.rsqrt(var + 1e-5)

    # ---- concat([bn, action]) @ W2 as split matmul, + bias, ReLU -----------
    h = (jnp.dot(bn, w2h_ref[...], preferred_element_type=jnp.float32)
         + jnp.dot(action, w2a_ref[...], preferred_element_type=jnp.float32)
         + b2)
    h = jnp.maximum(h, 0.0)

    # ---- fc3: single output column -> VPU multiply + lane reduction --------
    # (avoids an MXU matmul whose 128/256-lane output column is >99% padding)
    q = jnp.sum(h * w3_row, axis=-1, keepdims=True) + b3
    # Output last dim of 1 lowers to masked stores; fine at small B.  For very
    # large B, return a lane-dense slab and slice in the wrapper instead.
    out_ref[...] = q.astype(out_ref.dtype)


def critic_forward(state, action, params):
    """Runs the whole critic forward pass in one Pallas kernel call."""
    B = state.shape[0]
    args = (state, action,
            params["w1"], params["w2h"], params["w2a"],
            params["packed"])
    vmem_spec = pl.BlockSpec(memory_space=pltpu.MemorySpace.VMEM)
    return pl.pallas_call(
        critic_kernel,
        out_shape=jax.ShapeDtypeStruct((B, 1), jnp.float32),
        in_specs=[vmem_spec] * len(args),
        out_specs=vmem_spec,
    )(*args)


# --------------------------- parameter setup (plain JAX glue) ---------------

def spectral_normalize(w, key, n_iter=50):
    """w: [out, in].  Returns w / sigma_max (power iteration, PyTorch-style)."""
    u = jax.random.normal(key, (w.shape[0],), dtype=w.dtype)
    u = u / (jnp.linalg.norm(u) + 1e-12)
    v = jnp.zeros((w.shape[1],), dtype=w.dtype)
    for _ in range(n_iter):
        v = w.T @ u
        v = v / (jnp.linalg.norm(v) + 1e-12)
        u = w @ v
        u = u / (jnp.linalg.norm(u) + 1e-12)
    sigma = u @ (w @ v)
    return w / sigma


def init_params(key, state_size, action_size, hidden_units):
    ks = jax.random.split(key, 8)

    # PyTorch hidden_init: lim = 1/sqrt(weight.size(0)) = 1/sqrt(out_features)
    lim1 = 1.0 / np.sqrt(hidden_units)         # fc1
    lim2 = 1.0 / np.sqrt(hidden_units)         # fc2
    lim3 = 0.003                               # fc3

    # weights in PyTorch convention [out, in], then transpose for the kernel
    w1 = jax.random.uniform(ks[0], (hidden_units, state_size),
                            minval=-lim1, maxval=lim1, dtype=jnp.float32)
    w2 = jax.random.uniform(ks[1], (hidden_units, hidden_units + action_size),
                            minval=-lim2, maxval=lim2, dtype=jnp.float32)
    w3 = jax.random.uniform(ks[2], (1, hidden_units),
                            minval=-lim3, maxval=lim3, dtype=jnp.float32)

    # spectral norm on fc2 weight (done in plain JAX; kernel sees normalized W)
    w2 = spectral_normalize(w2, ks[3])

    # biases keep default nn.Linear init: U(-1/sqrt(fan_in), 1/sqrt(fan_in))
    b1 = jax.random.uniform(ks[4], (hidden_units,),
                            minval=-1.0 / np.sqrt(state_size),
                            maxval=1.0 / np.sqrt(state_size), dtype=jnp.float32)
    b2 = jax.random.uniform(ks[5], (hidden_units,),
                            minval=-1.0 / np.sqrt(hidden_units + action_size),
                            maxval=1.0 / np.sqrt(hidden_units + action_size),
                            dtype=jnp.float32)
    b3 = jax.random.uniform(ks[6], (),
                            minval=-1.0 / np.sqrt(hidden_units),
                            maxval=1.0 / np.sqrt(hidden_units), dtype=jnp.float32)

    # Pack the small parameters into a single (4, H) array (one DMA):
    #   row 0 = b1, row 1 = b2, row 2 = fc3 weight row, [3, 0] = b3.
    packed = jnp.zeros((4, hidden_units), dtype=jnp.float32)
    packed = packed.at[0].set(b1)
    packed = packed.at[1].set(b2)
    packed = packed.at[2].set(w3[0])
    packed = packed.at[3, 0].set(b3)

    # transpose to [in, out] for kernel; split fc2 into hidden / action parts
    w2_t = w2.T                                # [H+A, H]
    return {
        "w1": w1.T,                            # [S, H]
        "w2h": w2_t[:hidden_units, :],         # [H, H]
        "w2a": w2_t[hidden_units:, :],         # [A, H]
        "packed": packed,                      # [4, H]
    }


def reference_forward(state, action, params):
    """Pure-JAX reference of the same semantics (for a correctness check).

    Uses the numerically-safer E[(x-mean)^2] variance form so it also cross-
    checks the kernel's one-pass variance."""
    b1 = params["packed"][0:1, :]
    b2 = params["packed"][1:2, :]
    w3 = params["packed"][2:3, :].T            # [H, 1]
    b3 = params["packed"][3, 0]

    xs = jnp.maximum(state @ params["w1"] + b1, 0.0)
    mean = jnp.mean(xs, axis=0, keepdims=True)
    var = jnp.mean((xs - mean) ** 2, axis=0, keepdims=True)
    bn = (xs - mean) / jnp.sqrt(var + 1e-5)
    x = jnp.concatenate([bn, action], axis=1)
    w2 = jnp.concatenate([params["w2h"], params["w2a"]], axis=0)
    h = jnp.maximum(x @ w2 + b2, 0.0)
    return h @ w3 + b3


if __name__ == "__main__":
    # Small shapes consistent with the module: state_size=16, action_size=4,
    # hidden_units=32, batch=8.
    B, S, A, H = 8, 16, 4, 32

    key = jax.random.PRNGKey(0)
    k_state, k_action, k_params = jax.random.split(key, 3)

    state = jax.random.normal(k_state, (B, S), dtype=jnp.float32)
    action = jax.random.uniform(k_action, (B, A), minval=-1.0, maxval=1.0,
                                dtype=jnp.float32)
    params = init_params(k_params, S, A, H)

    q = critic_forward(state, action, params)
    q = jax.block_until_ready(q)

    q_ref = reference_forward(state, action, params)
    assert q.shape == (B, 1)
    np.testing.assert_allclose(np.asarray(q), np.asarray(q_ref),
                               rtol=1e-4, atol=1e-4)
    print("KERNEL_OK")
</pallas_src>

<mosaic_0001>
module attributes {stable_mosaic.version = 11 : i64} {
  func.func @critic_kernel(%arg0: memref<8x16xf32, #tpu.memory_space<vmem>>, %arg1: memref<8x4xf32, #tpu.memory_space<vmem>>, %arg2: memref<16x32xf32, #tpu.memory_space<vmem>>, %arg3: memref<32x32xf32, #tpu.memory_space<vmem>>, %arg4: memref<4x32xf32, #tpu.memory_space<vmem>>, %arg5: memref<4x32xf32, #tpu.memory_space<vmem>>, %arg6: memref<8x1xf32, #tpu.memory_space<vmem>>) attributes {dimension_semantics = [], scalar_prefetch = 0 : i64, scratch_operands = 0 : i64, tpu.core_type = #tpu.core_type<tc>} {
    %c0 = arith.constant 0 : index
    %c0_0 = arith.constant 0 : index
    %0 = vector.load %arg0[%c0, %c0_0] : memref<8x16xf32, #tpu.memory_space<vmem>>, vector<8x16xf32>
    %c0_1 = arith.constant 0 : index
    %c0_2 = arith.constant 0 : index
    %1 = vector.load %arg1[%c0_1, %c0_2] : memref<8x4xf32, #tpu.memory_space<vmem>>, vector<8x4xf32>
    %c0_3 = arith.constant 0 : index
    %c0_4 = arith.constant 0 : index
    %2 = vector.load %arg5[%c0_3, %c0_4] : memref<4x32xf32, #tpu.memory_space<vmem>>, vector<4x32xf32>
    %3 = vector.extract_strided_slice %2 {offsets = [0, 0], sizes = [1, 32], strides = [1, 1]} : vector<4x32xf32> to vector<1x32xf32>
    %4 = vector.extract_strided_slice %2 {offsets = [1, 0], sizes = [1, 32], strides = [1, 1]} : vector<4x32xf32> to vector<1x32xf32>
    %5 = vector.extract_strided_slice %2 {offsets = [2, 0], sizes = [1, 32], strides = [1, 1]} : vector<4x32xf32> to vector<1x32xf32>
    %6 = vector.extract_strided_slice %2 {offsets = [3, 0], sizes = [1, 1], strides = [1, 1]} : vector<4x32xf32> to vector<1x1xf32>
    %7 = vector.extract %6[0, 0] : f32 from vector<1x1xf32>
    %c0_5 = arith.constant 0 : index
    %c0_6 = arith.constant 0 : index
    %8 = vector.load %arg2[%c0_5, %c0_6] : memref<16x32xf32, #tpu.memory_space<vmem>>, vector<16x32xf32>
    %cst = arith.constant dense<0.000000e+00> : vector<8x32xf32>
    %9 = tpu.matmul %0, %8, %cst {dimension_numbers = #tpu.dot_dimension_numbers<[1], [0], [0], [1], [0, 0, 1, 1], [], []>} : vector<8x16xf32>, vector<16x32xf32>, vector<8x32xf32> -> vector<8x32xf32>
    %10 = vector.broadcast %3 : vector<1x32xf32> to vector<8x32xf32>
    %11 = arith.addf %9, %10 : vector<8x32xf32>
    %cst_7 = arith.constant 0.000000e+00 : f32
    %12 = vector.broadcast %cst_7 : f32 to vector<8x32xf32>
    %13 = arith.maximumf %11, %12 : vector<8x32xf32>
    %cst_8 = arith.constant dense<0.000000e+00> : vector<32xf32>
    %14 = vector.multi_reduction <add>, %13, %cst_8 [0] : vector<8x32xf32> to vector<32xf32>
    %15 = vector.shape_cast %14 : vector<32xf32> to vector<1x32xf32>
    %16 = arith.mulf %13, %13 : vector<8x32xf32>
    %cst_9 = arith.constant dense<0.000000e+00> : vector<32xf32>
    %17 = vector.multi_reduction <add>, %16, %cst_9 [0] : vector<8x32xf32> to vector<32xf32>
    %18 = vector.shape_cast %17 : vector<32xf32> to vector<1x32xf32>
    %cst_10 = arith.constant 1.250000e-01 : f32
    %19 = vector.broadcast %cst_10 : f32 to vector<1x32xf32>
    %20 = arith.mulf %15, %19 : vector<1x32xf32>
    %cst_11 = arith.constant 1.250000e-01 : f32
    %21 = vector.broadcast %cst_11 : f32 to vector<1x32xf32>
    %22 = arith.mulf %18, %21 : vector<1x32xf32>
    %23 = arith.mulf %20, %20 : vector<1x32xf32>
    %24 = arith.subf %22, %23 : vector<1x32xf32>
    %cst_12 = arith.constant 0.000000e+00 : f32
    %25 = vector.broadcast %cst_12 : f32 to vector<1x32xf32>
    %26 = arith.maximumf %24, %25 : vector<1x32xf32>
    %27 = vector.broadcast %20 : vector<1x32xf32> to vector<8x32xf32>
    %28 = arith.subf %13, %27 : vector<8x32xf32>
    %cst_13 = arith.constant 9.99999974E-6 : f32
    %29 = vector.broadcast %cst_13 : f32 to vector<1x32xf32>
    %30 = arith.addf %26, %29 : vector<1x32xf32>
    %31 = math.rsqrt %30 : vector<1x32xf32>
    %32 = vector.broadcast %31 : vector<1x32xf32> to vector<8x32xf32>
    %33 = arith.mulf %28, %32 : vector<8x32xf32>
    %c0_14 = arith.constant 0 : index
    %c0_15 = arith.constant 0 : index
    %34 = vector.load %arg3[%c0_14, %c0_15] : memref<32x32xf32, #tpu.memory_space<vmem>>, vector<32x32xf32>
    %cst_16 = arith.constant dense<0.000000e+00> : vector<8x32xf32>
    %35 = tpu.matmul %33, %34, %cst_16 {dimension_numbers = #tpu.dot_dimension_numbers<[1], [0], [0], [1], [0, 0, 1, 1], [], []>} : vector<8x32xf32>, vector<32x32xf32>, vector<8x32xf32> -> vector<8x32xf32>
    %c0_17 = arith.constant 0 : index
    %c0_18 = arith.constant 0 : index
    %36 = vector.load %arg4[%c0_17, %c0_18] : memref<4x32xf32, #tpu.memory_space<vmem>>, vector<4x32xf32>
    %cst_19 = arith.constant dense<0.000000e+00> : vector<8x32xf32>
    %37 = tpu.matmul %1, %36, %cst_19 {dimension_numbers = #tpu.dot_dimension_numbers<[1], [0], [0], [1], [0, 0, 1, 1], [], []>} : vector<8x4xf32>, vector<4x32xf32>, vector<8x32xf32> -> vector<8x32xf32>
    %38 = arith.addf %35, %37 : vector<8x32xf32>
    %39 = vector.broadcast %4 : vector<1x32xf32> to vector<8x32xf32>
    %40 = arith.addf %38, %39 : vector<8x32xf32>
    %cst_20 = arith.constant 0.000000e+00 : f32
    %41 = vector.broadcast %cst_20 : f32 to vector<8x32xf32>
    %42 = arith.maximumf %40, %41 : vector<8x32xf32>
    %43 = vector.broadcast %5 : vector<1x32xf32> to vector<8x32xf32>
    %44 = arith.mulf %42, %43 : vector<8x32xf32>
    %cst_21 = arith.constant dense<0.000000e+00> : vector<8xf32>
    %45 = vector.multi_reduction <add>, %44, %cst_21 [1] : vector<8x32xf32> to vector<8xf32>
    %46 = vector.shape_cast %45 : vector<8xf32> to vector<8x1xf32>
    %47 = vector.broadcast %7 : f32 to vector<8x1xf32>
    %48 = arith.addf %46, %47 : vector<8x1xf32>
    %c0_22 = arith.constant 0 : index
    %c0_23 = arith.constant 0 : index
    %49 = vector.load %arg6[%c0_22, %c0_23] : memref<8x1xf32, #tpu.memory_space<vmem>>, vector<8x1xf32>
    tpu.vector_store %arg6[%c0_22, %c0_23], %48 {strides = array<i32>} : memref<8x1xf32, #tpu.memory_space<vmem>>, vector<8x1xf32>,
    return
  }
}

</mosaic_0001>

<llo_original>
// kernel: tpu_custom_call.1
$region0: #{tpu_custom_call.1}
  #allocation0 [shape = 'u32[]', space=smem, size = 0x4, offset = 0x4, fixed_abs, tag = 'smem constant byte address 0x4 - core index']
  #allocation1 [shape = 'u32[72,128]{1,0:T(1,128)}', space=vmem, size = 0x9000, scoped, tag = 'internal scratch']
  %s0 = inlined_call_operand.vmem [shape: f32[8,16], index: 0, kind: input, shape index: {}]
  %s1 = inlined_call_operand.vmem [shape: f32[8,4], index: 1, kind: input, shape index: {}]
  %s2 = inlined_call_operand.hbm [shape: f32[16,32], index: 2, kind: input, shape index: {}]
  %s3 = inlined_call_operand.hbm [shape: f32[32,32], index: 3, kind: input, shape index: {}]
  %s4 = inlined_call_operand.vmem [shape: f32[4,32], index: 4, kind: input, shape index: {}]
  %s5 = inlined_call_operand.vmem [shape: f32[4,32], index: 5, kind: input, shape index: {}]
  %s6 = inlined_call_operand.vmem [shape: f32[8,1], index: 6, kind: output, shape index: {}]
  %s7 = sld [smem:[#allocation0]]
  $region42: #{tpu_custom_call.1} parent=0
    _
  %s9 = ssub.s32 1, %s7
  %s10 = scalar_select 0, %s9, %s7
  $region1: #{tpu_custom_call.1} parent=0
    #allocation2 [shape = 'u8[8192]{0}', space=vmem, size = 0x2000, scoped, tag = 'input window, operand 2, single buffered']
    #allocation3 [shape = 's32[1]{0}', space=sflag, size = 0x4, scoped, tag = 'scoped memory for tpu_custom_call.1']
    #allocation4 [shape = 'u8[16384]{0}', space=vmem, size = 0x4000, scoped, tag = 'input window, operand 3, single buffered']
    #allocation5 [shape = 's32[1]{0}', space=sflag, size = 0x4, scoped, tag = 'scoped memory for tpu_custom_call.1']
    %11 = vsyncpa [#allocation3], 0
    %12 = vsyncpa [#allocation5], 0
    // Predicated region
    $region2: #{tpu_custom_call.1} parent=1 // pred_check
      _
    $region3: #{tpu_custom_call.1} parent=1 // pred_check_branch
      %14 = sbr.rel (0) target = $region5
    $region4: #{tpu_custom_call.1} parent=1 // pred_region
      _
    $region5: #{tpu_custom_call.1} parent=1 // pred_fallthru
      _
    // Predicated region
    $region6: #{tpu_custom_call.1} parent=1 // pred_check
      _
    $region7: #{tpu_custom_call.1} parent=1 // pred_check_branch
      %16 = sbr.rel (0) target = $region9
    $region8: #{tpu_custom_call.1} parent=1 // pred_region
      _
    $region9: #{tpu_custom_call.1} parent=1 // pred_fallthru
      _
    // Predicated region
    $region10: #{tpu_custom_call.1} parent=1 // pred_check
      _
    $region11: #{tpu_custom_call.1} parent=1 // pred_check_branch
      %18 = sbr.rel (0) target = $region13
    $region12: #{tpu_custom_call.1} parent=1 // pred_region
      %20 = vsyncadd [#allocation3], 0
      %s21 = sshll.u32 %s2, 4
      %s22 = int_to_ptr.hbm [resolvable:$true] %s21
      %s23 = sshll.u32 [#allocation2], 4
      %s24 = int_to_ptr.vmem [resolvable:$true] %s23
      %29 = dma.hbm_to_vmem [thread:$0]  %s22, 256, %s24, [#allocation3], 128, 128, 8
    $region13: #{tpu_custom_call.1} parent=1 // pred_fallthru
      _
    // Predicated region
    $region14: #{tpu_custom_call.1} parent=1 // pred_check
      _
    $region15: #{tpu_custom_call.1} parent=1 // pred_check_branch
      %31 = sbr.rel (0) target = $region17
    $region16: #{tpu_custom_call.1} parent=1 // pred_region
      %33 = vsyncadd [#allocation5], 0
      %s34 = sshll.u32 %s3, 4
      %s35 = int_to_ptr.hbm [resolvable:$true] %s34
      %s36 = sshll.u32 [#allocation4], 4
      %s37 = int_to_ptr.vmem [resolvable:$true] %s36
      %42 = dma.hbm_to_vmem [thread:$0]  %s35, 512, %s37, [#allocation5], 128, 128, 8
    $region17: #{tpu_custom_call.1} parent=1 // pred_fallthru
      _
    // Predicated region
    $region18: #{tpu_custom_call.1} parent=1 // pred_check
      _
    $region19: #{tpu_custom_call.1} parent=1 // pred_check_branch
      %44 = sbr.rel (0) target = $region21
    $region20: #{tpu_custom_call.1} parent=1 // pred_region
      _
    $region21: #{tpu_custom_call.1} parent=1 // pred_fallthru
      _
    // Predicated region
    $region22: #{tpu_custom_call.1} parent=1 // pred_check
      _
    $region23: #{tpu_custom_call.1} parent=1 // pred_check_branch
      %46 = sbr.rel (0) target = $region25
    $region24: #{tpu_custom_call.1} parent=1 // pred_region
      _
    $region25: #{tpu_custom_call.1} parent=1 // pred_fallthru
      _
    // Predicated region
    $region26: #{tpu_custom_call.1} parent=1 // pred_check
      _
    $region27: #{tpu_custom_call.1} parent=1 // pred_check_branch
      %48 = sbr.rel (0) target = $region29
    $region28: #{tpu_custom_call.1} parent=1 // pred_region
      %50 = dma.done [#allocation3], 256
    $region29: #{tpu_custom_call.1} parent=1 // pred_fallthru
      _
    // Predicated region
    $region30: #{tpu_custom_call.1} parent=1 // pred_check
      _
    $region31: #{tpu_custom_call.1} parent=1 // pred_check_branch
      %52 = sbr.rel (0) target = $region33
    $region32: #{tpu_custom_call.1} parent=1 // pred_region
      %54 = dma.done [#allocation5], 512
    $region33: #{tpu_custom_call.1} parent=1 // pred_fallthru
      _
    %v55 = vld [vmem:[%s0] sm:$0xff]
    %v56 = vld [vmem:[%s1] sm:$0xff]
    %v57 = vld [vmem:[%s5] sm:$0xf]
    %v58 = vrot.slane %v57, 3
    %s59 = vtos %v58
    %v60 = vld [vmem:[#allocation2] sm:$0xff]
    %v61 = vld [vmem:[#allocation2 + $0x8] sm:$0xff]
    %v62 = vperm.slane %v57, 0
    %vm63 = vcmask 130048
    %v65 = vsel %vm63, %v55, 0
    %67 = vmatpush.msra.mxu0 0.0
    %68 = vmatpush.msra.mxu0 0.0
    %69 = vmatpush.msra.mxu0 0.0
    %70 = vmatpush.msra.mxu0 0.0
    %71 = vmatpush.msra.mxu0 0.0
    %72 = vmatpush.msra.mxu0 0.0
    %73 = vmatpush.msra.mxu0 0.0
    %74 = vmatpush.msra.mxu0 0.0
    %75 = vmatpush.msra.mxu0 0.0
    %76 = vmatpush.msra.mxu0 0.0
    %77 = vmatpush.msra.mxu0 0.0
    %78 = vmatpush.msra.mxu0 0.0
    %79 = vmatpush.msra.mxu0 0.0
    %80 = vmatpush.msra.mxu0 0.0
    %81 = vmatpush.msra.mxu0 %v61
    %82 = vmatpush.msra.mxu0 %v60
    %83 = vmatmul.f32.gmra.mxu0 %v65
    %v84 = vpop.f32.mrf.mxu0
    %v85 = vadd.f32 %v62, %v84
    %86 = vdwg.mxu0
    %v87 = vmax.f32 %v85, 0.0
    %vm88 = vcmask 261120
    %v89 = vsel %vm88, %v87, 0.0
    %v90 = vrot.slane %v89, 4
    %v91 = vadd.f32 %v89, %v90
    %v92 = vrot.slane %v91, 2
    %v93 = vadd.f32 %v91, %v92
    %v94 = vrot.slane %v93, 1
    %v95 = vadd.f32 %v93, %v94
    %v96 = vmul.f32 %v87, %v87
    %v97 = vsel %vm88, %v96, 0.0
    %v98 = vrot.slane %v97, 4
    %v99 = vadd.f32 %v97, %v98
    %v100 = vrot.slane %v99, 2
    %v101 = vadd.f32 %v99, %v100
    %v102 = vrot.slane %v101, 1
    %v103 = vadd.f32 %v101, %v102
    %v104 = vmul.f32 %v95, 0.125
    %v105 = vmul.f32 %v103, 0.125
    %v106 = vmul.f32 %v104, %v104
    %v107 = vsub.f32 %v105, %v106
    %v108 = vmax.f32 %v107, 0.0
    %v109 = vsub.f32 %v87, %v104
    %v110 = vadd.f32 %v108, 1e-05
    %v111 = vrsqrt.pop %v110
    %v112 = vmul.f32 %v111, %v110
    %v113 = vmul.f32 %v112, %v111
    %v114 = vmul.f32 0.5, %v113
    %v115 = vsub.f32 1.5, %v114
    %v116 = vmul.f32 %v111, %v115
    %vm117 = vweird.f32 %v110
    %vm118 = vweird.f32 %v111
    %vm119 = vmor %vm117, %vm118
    %v120 = vsel %vm119, %v111, %v116
    %v121 = vmul.f32 %v109, %v120
    %v122 = vld [vmem:[#allocation4] sm:$0xff]
    %v123 = vld [vmem:[#allocation4 + $0x8] sm:$0xff]
    %v124 = vld [vmem:[#allocation4 + $0x10] sm:$0xff]
    %v125 = vld [vmem:[#allocation4 + $0x18] sm:$0xff]
    %v126 = vld [vmem:[%s4] sm:$0xf]
    %vm127 = vcmask 31744
    %v129 = vsel %vm127, %v56, 0
    %vm131 = vcmask 1043456
    %v133 = vsel %vm131, %v126, 0
    %135 = vmatpush.msra.mxu0 0.0
    %136 = vmatpush.msra.mxu0 0.0
    %137 = vmatpush.msra.mxu0 0.0
    %138 = vmatpush.msra.mxu0 0.0
    %139 = vmatpush.msra.mxu0 0.0
    %140 = vmatpush.msra.mxu0 0.0
    %141 = vmatpush.msra.mxu0 0.0
    %142 = vmatpush.msra.mxu0 0.0
    %143 = vmatpush.msra.mxu0 0.0
    %144 = vmatpush.msra.mxu0 0.0
    %145 = vmatpush.msra.mxu0 0.0
    %146 = vmatpush.msra.mxu0 0.0
    %147 = vmatpush.msra.mxu0 0.0
    %148 = vmatpush.msra.mxu0 0.0
    %149 = vmatpush.msra.mxu0 0.0
    %150 = vmatpush.msra.mxu0 %v133
    %151 = vmatmul.f32.gmra.mxu0 %v129
    %v152 = vpop.f32.mrf.mxu0
    %v153 = vadd.f32 0.0, %v152
    %154 = vdwg.mxu0
    %v156 = vsel %vm88, %v121, 0
    %158 = vmatpush.msra.mxu0 0.0
    %159 = vmatpush.msra.mxu0 0.0
    %160 = vmatpush.msra.mxu0 0.0
    %161 = vmatpush.msra.mxu0 0.0
    %162 = vmatpush.msra.mxu0 0.0
    %163 = vmatpush.msra.mxu0 0.0
    %164 = vmatpush.msra.mxu0 0.0
    %165 = vmatpush.msra.mxu0 0.0
    %166 = vmatpush.msra.mxu0 0.0
    %167 = vmatpush.msra.mxu0 0.0
    %168 = vmatpush.msra.mxu0 0.0
    %169 = vmatpush.msra.mxu0 0.0
    %170 = vmatpush.msra.mxu0 %v125
    %171 = vmatpush.msra.mxu0 %v124
    %172 = vmatpush.msra.mxu0 %v123
    %173 = vmatpush.msra.mxu0 %v122
    %174 = vmatmul.f32.gmra.mxu0 %v156
    %v175 = vpop.f32.mrf.mxu0
    %v176 = vadd.f32 %v153, %v175
    %177 = vdwg.mxu0
    %v178 = vperm.slane %v57, 1
    %v179 = vadd.f32 %v176, %v178
    %v180 = vmax.f32 %v179, 0.0
    %v181 = vperm.slane %v57, 2
    %v182 = vmul.f32 %v180, %v181
    %v183 = vsel %vm88, %v182, 0.0
    %184 = vadd.xlane.f32.xlu0 %v183
    %v185 = vpop.xlane.xlu0 %184
    %v186 = vstv %s59
    %v187 = vadd.f32 %v185, %v186
    %vm188 = vcmask 7168
    %189 = vst.msk [vmem:[%s6] sm:$0xff] %vm188, %v187
    // Predicated region
    $region34: #{tpu_custom_call.1} parent=1 // pred_check
      _
    $region35: #{tpu_custom_call.1} parent=1 // pred_check_branch
      %191 = sbr.rel (0) target = $region37
    $region36: #{tpu_custom_call.1} parent=1 // pred_region
      _
    $region37: #{tpu_custom_call.1} parent=1 // pred_fallthru
      _
    // Predicated region
    $region38: #{tpu_custom_call.1} parent=1 // pred_check
      _
    $region39: #{tpu_custom_call.1} parent=1 // pred_check_branch
      %193 = sbr.rel (0) target = $region41
    $region40: #{tpu_custom_call.1} parent=1 // pred_region
      _
    $region41: #{tpu_custom_call.1} parent=1 // pred_fallthru
      _
    %194 = vsyncpa [#allocation3], 1
    %195 = vsyncpa [#allocation5], 1

</llo_original>
